<compile_context>
chip_gen: v7x
topology: tpu7x:2x2x1
jax: 0.10.0
libtpu: 0.0.40
codegen_flags: <defaults>
</compile_context>

<pallas_src>
import functools

import jax
import jax.numpy as jnp
from jax import lax
from jax.experimental import pallas as pl
from jax.experimental.pallas import tpu as pltpu


def _round_up(x, m):
    return ((x + m - 1) // m) * m


# ---------------------------------------------------------------------------
# Generic tiled GEMM + bias kernel (used for input projection and final FC).
# ---------------------------------------------------------------------------
def _matmul_bias_kernel(a_ref, w_ref, b_ref, o_ref):
    o_ref[...] = (
        jnp.dot(a_ref[...], w_ref[...], preferred_element_type=jnp.float32)
        + b_ref[...]
    )


def matmul_bias(a, w, b, *, m_tile=256, n_tile=512):
    """(M, K) bf16 @ (K, N) bf16 + (1, N) f32 -> (M, N) f32, tiled over M and N."""
    M, K = a.shape
    _, N = w.shape
    mt = min(m_tile, M)          # M is always a multiple of 8 (Bp padding)
    nt = min(n_tile, N)          # N is always a multiple of 128 (Hp/Vp padding)
    grid = (pl.cdiv(M, mt), pl.cdiv(N, nt))
    return pl.pallas_call(
        _matmul_bias_kernel,
        out_shape=jax.ShapeDtypeStruct((M, N), jnp.float32),
        grid_spec=pltpu.PrefetchScalarGridSpec(
            num_scalar_prefetch=0,
            grid=grid,
            in_specs=[
                pl.BlockSpec((mt, K), lambda i, j: (i, 0)),
                pl.BlockSpec((K, nt), lambda i, j: (0, j)),
                pl.BlockSpec((1, nt), lambda i, j: (0, j)),
            ],
            out_specs=pl.BlockSpec((mt, nt), lambda i, j: (i, j)),
        ),
        compiler_params=pltpu.CompilerParams(
            dimension_semantics=("parallel", "parallel"),
            vmem_limit_bytes=48 * 1024 * 1024,
        ),
    )(a, w, b)


# ---------------------------------------------------------------------------
# Sequential 2-layer LSTM recurrence kernel.
#   xp_ref   : (T, Bp, 4Hp) f32  precomputed layer-0 input projection (+ bias)
#   whh0_ref : (Hp, 4Hp)    bf16 layer-0 recurrent weight (transposed, padded)
#   w1_ref   : (2Hp, 4Hp)   bf16 layer-1 [W_ih1^T ; W_hh1^T] stacked
#   b1_ref   : (1, 4Hp)     f32  layer-1 combined bias
#   h1_out   : (T, Bp, Hp)  f32  layer-1 hidden states for all timesteps
# ---------------------------------------------------------------------------
def lstm_recurrence_kernel(xp_ref, whh0_ref, w1_ref, b1_ref, h1_out_ref,
                           *, hp, unroll):
    Hp = hp
    T, Bp, _ = xp_ref.shape

    def gates_to_hc(g, c_prev):
        # Hp is a multiple of 128 -> every slice is lane-tile aligned (free view).
        i_g = jax.nn.sigmoid(g[:, 0 * Hp:1 * Hp])
        f_g = jax.nn.sigmoid(g[:, 1 * Hp:2 * Hp])
        g_g = jnp.tanh(g[:, 2 * Hp:3 * Hp])
        o_g = jax.nn.sigmoid(g[:, 3 * Hp:4 * Hp])
        c_new = f_g * c_prev + i_g * g_g
        h_new = o_g * jnp.tanh(c_new)
        return h_new, c_new

    def step(t, carry):
        h0, c0, h1, c1 = carry
        # layer 0: input projection is precomputed; only the h-recurrent matmul.
        g0 = xp_ref[t] + jnp.dot(
            h0.astype(jnp.bfloat16), whh0_ref[...],
            preferred_element_type=jnp.float32)
        h0, c0 = gates_to_hc(g0, c0)
        # layer 1: single fused matmul over [h0_new ; h1_prev].
        hcat = jnp.concatenate([h0, h1], axis=1).astype(jnp.bfloat16)  # (Bp, 2Hp)
        g1 = jnp.dot(hcat, w1_ref[...],
                     preferred_element_type=jnp.float32) + b1_ref[...]
        h1, c1 = gates_to_hc(g1, c1)
        h1_out_ref[t] = h1                           # full (8,128) unmasked store
        return (h0, c0, h1, c1)

    def unrolled_step(i, carry):
        t0 = i * unroll
        for u in range(unroll):                      # explicit unroll (static)
            carry = step(t0 + u, carry)
        return carry

    zeros = jnp.zeros((Bp, Hp), jnp.float32)
    carry = (zeros, zeros, zeros, zeros)
    n_main = T // unroll
    if n_main > 0:
        carry = lax.fori_loop(0, n_main, unrolled_step, carry)
    for t in range(n_main * unroll, T):              # static remainder
        carry = step(t, carry)


def lstm_recurrence(xp, whh0_t, w1_t, b1, *, hp, unroll=2):
    T, Bp, _ = xp.shape
    kernel = functools.partial(lstm_recurrence_kernel, hp=hp, unroll=unroll)
    vmem = pl.BlockSpec(memory_space=pltpu.MemorySpace.VMEM)
    return pl.pallas_call(
        kernel,
        out_shape=jax.ShapeDtypeStruct((T, Bp, hp), jnp.float32),
        in_specs=[vmem] * 4,
        out_specs=vmem,
        compiler_params=pltpu.CompilerParams(
            vmem_limit_bytes=48 * 1024 * 1024),
    )(xp, whh0_t, w1_t, b1)


# ---------------------------------------------------------------------------
# Weight preparation helpers (per-gate padding of H -> Hp, transposition).
# ---------------------------------------------------------------------------
def _pad_gate_weight_t(w, H, Hp, in_pad=None):
    """w: (4H, In) PyTorch-layout gate weight -> (In_pad, 4*Hp) transposed, zero-padded."""
    In = w.shape[1]
    w4 = w.reshape(4, H, In)
    w4 = jnp.pad(w4, ((0, 0), (0, Hp - H), (0, 0)))
    if in_pad is not None and in_pad > In:
        w4 = jnp.pad(w4, ((0, 0), (0, 0), (0, in_pad - In)))
    return jnp.transpose(w4, (2, 0, 1)).reshape(w4.shape[2], 4 * Hp)


def _pad_gate_bias(b, H, Hp):
    b4 = b.reshape(4, H)
    b4 = jnp.pad(b4, ((0, 0), (0, Hp - H)))
    return b4.reshape(1, 4 * Hp)


# ---------------------------------------------------------------------------
# Wrapper: embedding lookup (glue), padding, 3-phase Pallas pipeline.
# ---------------------------------------------------------------------------
def decoder_rnn_forward(params, features, captions):
    """Equivalent of DecoderRNN.forward(features, captions).

    features: (B, E) float32;  captions: (B, T_cap) int32
    returns:  (B, T_cap, vocab_size) float32
    """
    emb_table = params["embedding"]                    # (V, E)
    B, E = features.shape
    H = params["w_hh0"].shape[1]
    V = emb_table.shape[0]

    Hp = _round_up(H, 128)
    Vp = _round_up(V, 128)
    Bp = _round_up(B, 8)

    # glue: embedding gather + concat (data-dependent gather stays in XLA)
    embeds = jnp.take(emb_table, captions[:, :-1], axis=0)          # (B, T-1, E)
    x = jnp.concatenate([features[:, None, :], embeds], axis=1)     # (B, T, E)
    T = x.shape[1]

    # time-major, batch padded to sublane tile
    x_tbe = jnp.transpose(x, (1, 0, 2)).astype(jnp.float32)         # (T, B, E)
    x_tbe = jnp.pad(x_tbe, ((0, 0), (0, Bp - B), (0, 0)))           # (T, Bp, E)
    x_flat = x_tbe.reshape(T * Bp, E).astype(jnp.bfloat16)

    # weights: transposed, per-gate padded to Hp, bf16 matmul operands
    wih0_t = _pad_gate_weight_t(params["w_ih0"], H, Hp).astype(jnp.bfloat16)
    whh0_t = _pad_gate_weight_t(params["w_hh0"], H, Hp, in_pad=Hp).astype(jnp.bfloat16)
    b0 = _pad_gate_bias(params["b_ih0"] + params["b_hh0"], H, Hp)
    wih1_t = _pad_gate_weight_t(params["w_ih1"], H, Hp, in_pad=Hp)
    whh1_t = _pad_gate_weight_t(params["w_hh1"], H, Hp, in_pad=Hp)
    w1_t = jnp.concatenate([wih1_t, whh1_t], axis=0).astype(jnp.bfloat16)  # (2Hp, 4Hp)
    b1 = _pad_gate_bias(params["b_ih1"] + params["b_hh1"], H, Hp)
    wfc_t = jnp.pad(params["w_fc"].T,
                    ((0, Hp - H), (0, Vp - V))).astype(jnp.bfloat16)       # (Hp, Vp)
    bfc = jnp.pad(params["b_fc"], (0, Vp - V)).reshape(1, Vp)

    # Phase 1: hoisted layer-0 input projection (one big GEMM over all timesteps)
    xp = matmul_bias(x_flat, wih0_t, b0).reshape(T, Bp, 4 * Hp)

    # Phase 2: sequential recurrence (2 matmuls per step, vreg-carried state)
    h1_all = lstm_recurrence(xp, whh0_t, w1_t, b1, hp=Hp)

    # Phase 3: hoisted vocab projection (one big lane-dense GEMM tiled over V)
    h1_flat = h1_all.reshape(T * Bp, Hp).astype(jnp.bfloat16)
    logits = matmul_bias(h1_flat, wfc_t, bfc).reshape(T, Bp, Vp)

    return jnp.transpose(logits[:, :B, :V], (1, 0, 2))              # (B, T, V)


# ---------------------------------------------------------------------------
# Pure-JAX reference (f32) for correctness check.
# ---------------------------------------------------------------------------
def decoder_rnn_reference(params, features, captions):
    emb_table = params["embedding"]
    H = params["w_hh0"].shape[1]
    embeds = jnp.take(emb_table, captions[:, :-1], axis=0)
    x = jnp.concatenate([features[:, None, :], embeds], axis=1)     # (B, T, E)
    B, T, _ = x.shape

    def cell(x_t, h, c, w_ih, w_hh, b_ih, b_hh):
        g = x_t @ w_ih.T + b_ih + h @ w_hh.T + b_hh
        i = jax.nn.sigmoid(g[:, 0 * H:1 * H])
        f = jax.nn.sigmoid(g[:, 1 * H:2 * H])
        gg = jnp.tanh(g[:, 2 * H:3 * H])
        o = jax.nn.sigmoid(g[:, 3 * H:4 * H])
        c_new = f * c + i * gg
        h_new = o * jnp.tanh(c_new)
        return h_new, c_new

    def scan_fn(carry, x_t):
        h0, c0, h1, c1 = carry
        h0, c0 = cell(x_t, h0, c0, params["w_ih0"], params["w_hh0"],
                      params["b_ih0"], params["b_hh0"])
        h1, c1 = cell(h0, h1, c1, params["w_ih1"], params["w_hh1"],
                      params["b_ih1"], params["b_hh1"])
        logits = h1 @ params["w_fc"].T + params["b_fc"]
        return (h0, c0, h1, c1), logits

    zeros = jnp.zeros((B, H), jnp.float32)
    _, out = lax.scan(scan_fn, (zeros, zeros, zeros, zeros),
                      jnp.transpose(x, (1, 0, 2)))
    return jnp.transpose(out, (1, 0, 2))


# ---------------------------------------------------------------------------
# Deterministic parameter init (synthetic, PyTorch-like uniform scaling).
# ---------------------------------------------------------------------------
def init_params(key, embed_size, hidden_size, vocab_size):
    E, H, V = embed_size, hidden_size, vocab_size
    ks = jax.random.split(key, 12)
    s = 1.0 / jnp.sqrt(H)

    def u(k, shape):
        return jax.random.uniform(k, shape, jnp.float32, -s, s)

    return {
        "embedding": jax.random.normal(ks[0], (V, E), jnp.float32) * 0.1,
        "w_ih0": u(ks[1], (4 * H, E)),
        "w_hh0": u(ks[2], (4 * H, H)),
        "b_ih0": u(ks[3], (4 * H,)),
        "b_hh0": u(ks[4], (4 * H,)),
        "w_ih1": u(ks[5], (4 * H, H)),
        "w_hh1": u(ks[6], (4 * H, H)),
        "b_ih1": u(ks[7], (4 * H,)),
        "b_hh1": u(ks[8], (4 * H,)),
        "w_fc": u(ks[9], (V, H)),
        "b_fc": u(ks[10], (V,)),
    }


if __name__ == "__main__":
    # small shapes consistent with the module's forward
    B, E, H, V, T_cap = 2, 32, 32, 64, 8

    key = jax.random.PRNGKey(0)
    k_params, k_feat, k_cap = jax.random.split(key, 3)

    params = init_params(k_params, E, H, V)
    features = jax.random.normal(k_feat, (B, E), jnp.float32)
    captions = jax.random.randint(k_cap, (B, T_cap), 0, V, jnp.int32)

    out = decoder_rnn_forward(params, features, captions)
    out = jax.block_until_ready(out)

    ref = decoder_rnn_reference(params, features, captions)
    assert out.shape == (B, T_cap, V), out.shape
    err = float(jnp.max(jnp.abs(out - ref)))
    scale = float(jnp.max(jnp.abs(ref)))
    # bf16 matmul operands with f32 accumulation: allow small quantization error.
    assert err <= max(5e-2, 2e-2 * scale), (err, scale)

    print("KERNEL_OK")
</pallas_src>

<mosaic_0001>
module attributes {stable_mosaic.version = 11 : i64} {
  func.func @_matmul_bias_kernel(%arg0: i32, %arg1: i32, %arg2: memref<64x32xbf16, #tpu.memory_space<vmem>>, %arg3: memref<32x512xbf16, #tpu.memory_space<vmem>>, %arg4: memref<1x512xf32, #tpu.memory_space<vmem>>, %arg5: memref<64x512xf32, #tpu.memory_space<vmem>>) attributes {dimension_semantics = [#tpu.dimension_semantics<parallel>, #tpu.dimension_semantics<parallel>], iteration_bounds = array<i64: 1, 1>, scalar_prefetch = 0 : i64, scratch_operands = 0 : i64, tpu.core_type = #tpu.core_type<tc>, window_params = [{transform_indices = @transform_0, window_bounds = array<i64: 64, 32>}, {transform_indices = @transform_1, window_bounds = array<i64: 32, 512>}, {transform_indices = @transform_2, window_bounds = array<i64: 1, 512>}, {transform_indices = @transform_3, window_bounds = array<i64: 64, 512>}]} {
    %c0 = arith.constant 0 : index
    %c0_0 = arith.constant 0 : index
    %0 = vector.load %arg2[%c0, %c0_0] : memref<64x32xbf16, #tpu.memory_space<vmem>>, vector<64x32xbf16>
    %c0_1 = arith.constant 0 : index
    %c0_2 = arith.constant 0 : index
    %1 = vector.load %arg3[%c0_1, %c0_2] : memref<32x512xbf16, #tpu.memory_space<vmem>>, vector<32x512xbf16>
    %cst = arith.constant dense<0.000000e+00> : vector<64x512xf32>
    %2 = tpu.matmul %0, %1, %cst {dimension_numbers = #tpu.dot_dimension_numbers<[1], [0], [0], [1], [0, 0, 1, 1], [], []>} : vector<64x32xbf16>, vector<32x512xbf16>, vector<64x512xf32> -> vector<64x512xf32>
    %c0_3 = arith.constant 0 : index
    %c0_4 = arith.constant 0 : index
    %3 = vector.load %arg4[%c0_3, %c0_4] : memref<1x512xf32, #tpu.memory_space<vmem>>, vector<1x512xf32>
    %4 = vector.broadcast %3 : vector<1x512xf32> to vector<64x512xf32>
    %5 = arith.addf %2, %4 : vector<64x512xf32>
    %c0_5 = arith.constant 0 : index
    %c0_6 = arith.constant 0 : index
    %6 = vector.load %arg5[%c0_5, %c0_6] : memref<64x512xf32, #tpu.memory_space<vmem>>, vector<64x512xf32>
    tpu.vector_store %arg5[%c0_5, %c0_6], %5 {strides = array<i32>} : memref<64x512xf32, #tpu.memory_space<vmem>>, vector<64x512xf32>,
    return
  }
  func.func @transform_0(%arg0: i32, %arg1: i32) -> (i32, i32) {
    %c0_i32 = arith.constant 0 : i32
    %c0_i32_0 = arith.constant 0 : i32
    return %arg0, %c0_i32 : i32, i32
  }
  func.func @transform_1(%arg0: i32, %arg1: i32) -> (i32, i32) {
    %c0_i32 = arith.constant 0 : i32
    %c0_i32_0 = arith.constant 0 : i32
    return %c0_i32, %arg1 : i32, i32
  }
  func.func @transform_2(%arg0: i32, %arg1: i32) -> (i32, i32) {
    %c0_i32 = arith.constant 0 : i32
    %c0_i32_0 = arith.constant 0 : i32
    return %c0_i32, %arg1 : i32, i32
  }
  func.func @transform_3(%arg0: i32, %arg1: i32) -> (i32, i32) {
    %c0_i32 = arith.constant 0 : i32
    return %arg0, %arg1 : i32, i32
  }
}

</mosaic_0001>

<llo_original>
// kernel: tpu_custom_call.1
$region0: #{tpu_custom_call.1}
  #allocation0 [shape = 'u32[]', space=smem, size = 0x4, offset = 0x4, fixed_abs, tag = 'smem constant byte address 0x4 - core index']
  #allocation1 [shape = 'u32[144,128]{1,0:T(1,128)}', space=vmem, size = 0x12000, scoped, tag = 'internal scratch']
  %s0 = inlined_call_operand.vmem [shape: bf16[64,32], index: 0, kind: input, shape index: {}]
  %s1 = inlined_call_operand.hbm [shape: bf16[32,512], index: 1, kind: input, shape index: {}]
  %s2 = inlined_call_operand.vmem [shape: f32[1,512], index: 2, kind: input, shape index: {}]
  %s3 = inlined_call_operand.hbm [shape: f32[64,512], index: 3, kind: output, shape index: {}]
  %s4 = sld [smem:[#allocation0]]
  $region26: #{tpu_custom_call.1} parent=0
    _
  %s6 = ssub.s32 1, %s4
  %s7 = scalar_select 0, %s6, %s4
  $region1: #{tpu_custom_call.1} parent=0
    #allocation2 [shape = 'u8[32768]{0}', space=vmem, size = 0x8000, scoped, tag = 'input window, operand 1, single buffered']
    #allocation3 [shape = 's32[1]{0}', space=sflag, size = 0x4, scoped, tag = 'scoped memory for tpu_custom_call.1']
    #allocation4 [shape = 's32[1]{0}', space=sflag, size = 0x4, scoped, tag = 'scoped memory for tpu_custom_call.1']
    #allocation5 [shape = 'u8[131072]{0}', space=vmem, size = 0x20000, scoped, tag = 'output window, operand 0, single buffered']
    %8 = vsyncpa [#allocation3], 0
    %9 = vsyncpa [#allocation4], 0
    // Predicated region
    $region2: #{tpu_custom_call.1} parent=1 // pred_check
      _
    $region3: #{tpu_custom_call.1} parent=1 // pred_check_branch
      %11 = sbr.rel (0) target = $region5
    $region4: #{tpu_custom_call.1} parent=1 // pred_region
      _
    $region5: #{tpu_custom_call.1} parent=1 // pred_fallthru
      _
    // Predicated region
    $region6: #{tpu_custom_call.1} parent=1 // pred_check
      _
    $region7: #{tpu_custom_call.1} parent=1 // pred_check_branch
      %13 = sbr.rel (0) target = $region9
    $region8: #{tpu_custom_call.1} parent=1 // pred_region
      %s15 = ssub.s32 1024, 1024
      %16 = vsyncadd [#allocation3], %s15
      %s17 = sshll.u32 [#allocation2], 4
      %s18 = int_to_ptr.vmem [resolvable:$true] %s17
      %23 = dma.hbm_to_vmem [thread:$0]  %s1, 1024, %s18, [#allocation3], 256, 256, 16
    $region9: #{tpu_custom_call.1} parent=1 // pred_fallthru
      _
    // Predicated region
    $region10: #{tpu_custom_call.1} parent=1 // pred_check
      _
    $region11: #{tpu_custom_call.1} parent=1 // pred_check_branch
      %25 = sbr.rel (0) target = $region13
    $region12: #{tpu_custom_call.1} parent=1 // pred_region
      _
    $region13: #{tpu_custom_call.1} parent=1 // pred_fallthru
      _
    // Predicated region
    $region14: #{tpu_custom_call.1} parent=1 // pred_check
      _
    $region15: #{tpu_custom_call.1} parent=1 // pred_check_branch
      %27 = sbr.rel (0) target = $region17
    $region16: #{tpu_custom_call.1} parent=1 // pred_region
      %28 = dma.done [#allocation3], 1024
    $region17: #{tpu_custom_call.1} parent=1 // pred_fallthru
      _
    %v30 = vld [vmem:[%s0] sm:$0xf]
    %v31 = vld [vmem:[%s0 + $0x4] sm:$0xf]
    %v32 = vld [vmem:[%s0 + $0x8] sm:$0xf]
    %v33 = vld [vmem:[%s0 + $0xc] sm:$0xf]
    %v34 = vld [vmem:[%s0 + $0x10] sm:$0xf]
    %v35 = vld [vmem:[%s0 + $0x14] sm:$0xf]
    %v36 = vld [vmem:[%s0 + $0x18] sm:$0xf]
    %v37 = vld [vmem:[%s0 + $0x1c] sm:$0xf]
    %v38 = vld [vmem:[#allocation2] sm:$0xff]
    %v39 = vld [vmem:[#allocation2 + $0x8] sm:$0xff]
    %v40 = vld [vmem:[#allocation2 + $0x10] sm:$0xff]
    %v41 = vld [vmem:[#allocation2 + $0x18] sm:$0xff]
    %v42 = vld [vmem:[#allocation2 + $0x20] sm:$0xff]
    %v43 = vld [vmem:[#allocation2 + $0x28] sm:$0xff]
    %v44 = vld [vmem:[#allocation2 + $0x30] sm:$0xff]
    %v45 = vld [vmem:[#allocation2 + $0x38] sm:$0xff]
    %v46 = vld [vmem:[%s2] sm:$0xf]
    %v48 = vlaneseq
    %v49 = vshrl.u32 %v48, 7
    %v50 = vsub.s32 0, %v49
    %v51 = vrot.slane %v46, %v50
    %v52 = vlaneseq
    %v53 = vshrl.u32 %v52, 7
    %v54 = vsub.s32 1, %v53
    %v55 = vrot.slane %v46, %v54
    %v56 = vlaneseq
    %v57 = vshrl.u32 %v56, 7
    %v58 = vsub.s32 2, %v57
    %v59 = vrot.slane %v46, %v58
    %v60 = vlaneseq
    %v61 = vshrl.u32 %v60, 7
    %v62 = vsub.s32 3, %v61
    %v63 = vrot.slane %v46, %v62
    %v76 = vunpack.c.l.b16 %v30
    %v77 = vunpack.c.l.b16 %v31
    %v78 = vunpack.c.l.b16 %v32
    %v79 = vunpack.c.l.b16 %v33
    %v80 = vunpack.c.l.b16 %v34
    %v81 = vunpack.c.l.b16 %v35
    %v82 = vunpack.c.l.b16 %v36
    %v83 = vunpack.c.l.b16 %v37
    %v84 = vpack.c.b16 %v77, %v76
    %v85 = vpack.c.b16 %v79, %v78
    %v86 = vpack.c.b16 %v81, %v80
    %v87 = vpack.c.b16 %v83, %v82
    %v96 = vunpack.c.l.b16 %v38
    %v97 = vunpack.c.h.b16 %v38
    %v98 = vunpack.c.l.b16 %v39
    %v99 = vunpack.c.h.b16 %v39
    %v100 = vunpack.c.l.b16 %v40
    %v101 = vunpack.c.h.b16 %v40
    %v102 = vunpack.c.l.b16 %v41
    %v103 = vunpack.c.h.b16 %v41
    %v104 = vunpack.c.l.b16 %v42
    %v105 = vunpack.c.h.b16 %v42
    %v106 = vunpack.c.l.b16 %v43
    %v107 = vunpack.c.h.b16 %v43
    %v108 = vunpack.c.l.b16 %v44
    %v109 = vunpack.c.h.b16 %v44
    %v110 = vunpack.c.l.b16 %v45
    %v111 = vunpack.c.h.b16 %v45
    %v112 = vpack.c.b16 %v100, %v96
    %v113 = vpack.c.b16 %v101, %v97
    %v114 = vpack.c.b16 %v102, %v98
    %v115 = vpack.c.b16 %v103, %v99
    %v116 = vpack.c.b16 %v108, %v104
    %v117 = vpack.c.b16 %v109, %v105
    %v118 = vpack.c.b16 %v110, %v106
    %v119 = vpack.c.b16 %v111, %v107
    %vm128 = vcmask 261120
    %v130 = vsel %vm128, %v84, 0
    %v133 = vsel %vm128, %v85, 0
    %v136 = vsel %vm128, %v86, 0
    %v139 = vsel %vm128, %v87, 0
    %141 = vmatprep.subr.bf16.mxu0 %v113
    %142 = vmatpush1.bf16.msra.mxu0 %v112
    %143 = vmatprep.subr.bf16.mxu0 %v117
    %144 = vmatpush1.bf16.msra.mxu0 %v116
    %145 = vmatprep.subr.bf16.mxu0 0
    %146 = vmatpush1.bf16.msra.mxu0 0
    %147 = vmatprep.subr.bf16.mxu0 0
    %148 = vmatpush1.bf16.msra.mxu0 0
    %149 = vmatprep.subr.bf16.mxu0 0
    %150 = vmatpush1.bf16.msra.mxu0 0
    %151 = vmatprep.subr.bf16.mxu0 0
    %152 = vmatpush1.bf16.msra.mxu0 0
    %153 = vmatprep.subr.bf16.mxu0 0
    %154 = vmatpush1.bf16.msra.mxu0 0
    %155 = vmatprep.subr.bf16.mxu0 0
    %156 = vmatpush1.bf16.msra.mxu0 0
    %157 = vmatprep.subr.bf16.mxu0 0
    %158 = vmatpush1.bf16.msra.mxu0 0
    %159 = vmatprep.subr.bf16.mxu0 0
    %160 = vmatpush1.bf16.msra.mxu0 0
    %161 = vmatprep.subr.bf16.mxu0 0
    %162 = vmatpush1.bf16.msra.mxu0 0
    %163 = vmatprep.subr.bf16.mxu0 0
    %164 = vmatpush1.bf16.msra.mxu0 0
    %165 = vmatprep.subr.bf16.mxu0 0
    %166 = vmatpush1.bf16.msra.mxu0 0
    %167 = vmatprep.subr.bf16.mxu0 0
    %168 = vmatpush1.bf16.msra.mxu0 0
    %169 = vmatprep.subr.bf16.mxu0 0
    %170 = vmatpush1.bf16.msra.mxu0 0
    %171 = vmatprep.subr.bf16.mxu0 0
    %172 = vmatpush1.bf16.msra.mxu0 0
    %173 = vmatprep.mubr.bf16.mxu0 0
    %174 = vmatmul.mubr.bf16.gmra.mrb[0].mxu0 %v130
    %v175 = vpop.f32.mrb[0].mxu0
    %v176 = vadd.f32 %v51, %v175
    %v177 = vpop.f32.mrb[0].mxu0
    %v178 = vadd.f32 %v55, %v177
    %v179 = vpop.f32.mrb[0].mxu0
    %v180 = vadd.f32 %v51, %v179
    %v181 = vpop.f32.mrb[0].mxu0
    %v182 = vadd.f32 %v55, %v181
    %183 = vmatprep.mubr.bf16.mxu0 0
    %184 = vmatmul.mubr.bf16.gmra.mrb[0].mxu0 %v133
    %v185 = vpop.f32.mrb[0].mxu0
    %v186 = vadd.f32 %v51, %v185
    %v187 = vpop.f32.mrb[0].mxu0
    %v188 = vadd.f32 %v55, %v187
    %v189 = vpop.f32.mrb[0].mxu0
    %v190 = vadd.f32 %v51, %v189
    %v191 = vpop.f32.mrb[0].mxu0
    %v192 = vadd.f32 %v55, %v191
    %193 = vmatprep.mubr.bf16.mxu0 0
    %194 = vmatmul.mubr.bf16.gmra.mrb[0].mxu0 %v136
    %v195 = vpop.f32.mrb[0].mxu0
    %v196 = vadd.f32 %v51, %v195
    %v197 = vpop.f32.mrb[0].mxu0
    %v198 = vadd.f32 %v55, %v197
    %v199 = vpop.f32.mrb[0].mxu0
    %v200 = vadd.f32 %v51, %v199
    %v201 = vpop.f32.mrb[0].mxu0
    %v202 = vadd.f32 %v55, %v201
    %203 = vmatprep.mubr.bf16.mxu0 0
    %204 = vmatmul.mubr.bf16.gmra.mrb[0].mxu0 %v139
    %v205 = vpop.f32.mrb[0].mxu0
    %v206 = vadd.f32 %v51, %v205
    %v207 = vpop.f32.mrb[0].mxu0
    %v208 = vadd.f32 %v55, %v207
    %v209 = vpop.f32.mrb[0].mxu0
    %v210 = vadd.f32 %v51, %v209
    %v211 = vpop.f32.mrb[0].mxu0
    %v212 = vadd.f32 %v55, %v211
    %213 = vdwg.mxu0
    %214 = vmatprep.subr.bf16.mxu0 %v115
    %215 = vmatpush1.bf16.msra.mxu0 %v114
    %216 = vmatprep.subr.bf16.mxu0 %v119
    %217 = vmatpush1.bf16.msra.mxu0 %v118
    %218 = vmatprep.subr.bf16.mxu0 0
    %219 = vmatpush1.bf16.msra.mxu0 0
    %220 = vmatprep.subr.bf16.mxu0 0
    %221 = vmatpush1.bf16.msra.mxu0 0
    %222 = vmatprep.subr.bf16.mxu0 0
    %223 = vmatpush1.bf16.msra.mxu0 0
    %224 = vmatprep.subr.bf16.mxu0 0
    %225 = vmatpush1.bf16.msra.mxu0 0
    %226 = vmatprep.subr.bf16.mxu0 0
    %227 = vmatpush1.bf16.msra.mxu0 0
    %228 = vmatprep.subr.bf16.mxu0 0
    %229 = vmatpush1.bf16.msra.mxu0 0
    %230 = vmatprep.subr.bf16.mxu0 0
    %231 = vmatpush1.bf16.msra.mxu0 0
    %232 = vmatprep.subr.bf16.mxu0 0
    %233 = vmatpush1.bf16.msra.mxu0 0
    %234 = vmatprep.subr.bf16.mxu0 0
    %235 = vmatpush1.bf16.msra.mxu0 0
    %236 = vmatprep.subr.bf16.mxu0 0
    %237 = vmatpush1.bf16.msra.mxu0 0
    %238 = vmatprep.subr.bf16.mxu0 0
    %239 = vmatpush1.bf16.msra.mxu0 0
    %240 = vmatprep.subr.bf16.mxu0 0
    %241 = vmatpush1.bf16.msra.mxu0 0
    %242 = vmatprep.subr.bf16.mxu0 0
    %243 = vmatpush1.bf16.msra.mxu0 0
    %244 = vmatprep.subr.bf16.mxu0 0
    %245 = vmatpush1.bf16.msra.mxu0 0
    %246 = vmatprep.mubr.bf16.mxu0 0
    %247 = vmatmul.mubr.bf16.gmra.mrb[0].mxu0 %v130
    %v248 = vpop.f32.mrb[0].mxu0
    %v249 = vadd.f32 %v59, %v248
    %v250 = vpop.f32.mrb[0].mxu0
    %v251 = vadd.f32 %v63, %v250
    %v252 = vpop.f32.mrb[0].mxu0
    %v253 = vadd.f32 %v59, %v252
    %v254 = vpop.f32.mrb[0].mxu0
    %v255 = vadd.f32 %v63, %v254
    %256 = vmatprep.mubr.bf16.mxu0 0
    %257 = vmatmul.mubr.bf16.gmra.mrb[0].mxu0 %v133
    %v258 = vpop.f32.mrb[0].mxu0
    %v259 = vadd.f32 %v59, %v258
    %v260 = vpop.f32.mrb[0].mxu0
    %v261 = vadd.f32 %v63, %v260
    %v262 = vpop.f32.mrb[0].mxu0
    %v263 = vadd.f32 %v59, %v262
    %v264 = vpop.f32.mrb[0].mxu0
    %v265 = vadd.f32 %v63, %v264
    %266 = vmatprep.mubr.bf16.mxu0 0
    %267 = vmatmul.mubr.bf16.gmra.mrb[0].mxu0 %v136
    %v268 = vpop.f32.mrb[0].mxu0
    %v269 = vadd.f32 %v59, %v268
    %v270 = vpop.f32.mrb[0].mxu0
    %v271 = vadd.f32 %v63, %v270
    %v272 = vpop.f32.mrb[0].mxu0
    %v273 = vadd.f32 %v59, %v272
    %v274 = vpop.f32.mrb[0].mxu0
    %v275 = vadd.f32 %v63, %v274
    %276 = vmatprep.mubr.bf16.mxu0 0
    %277 = vmatmul.mubr.bf16.gmra.mrb[0].mxu0 %v139
    %v278 = vpop.f32.mrb[0].mxu0
    %v279 = vadd.f32 %v59, %v278
    %v280 = vpop.f32.mrb[0].mxu0
    %v281 = vadd.f32 %v63, %v280
    %v282 = vpop.f32.mrb[0].mxu0
    %v283 = vadd.f32 %v59, %v282
    %v284 = vpop.f32.mrb[0].mxu0
    %v285 = vadd.f32 %v63, %v284
    %286 = vdwg.mxu0
    %287 = vst [vmem:[#allocation5] sm:$0xff] %v176
    %288 = vst [vmem:[#allocation5 + $0x8] sm:$0xff] %v178
    %289 = vst [vmem:[#allocation5 + $0x10] sm:$0xff] %v249
    %290 = vst [vmem:[#allocation5 + $0x18] sm:$0xff] %v251
    %291 = vst [vmem:[#allocation5 + $0x20] sm:$0xff] %v180
    %292 = vst [vmem:[#allocation5 + $0x28] sm:$0xff] %v182
    %293 = vst [vmem:[#allocation5 + $0x30] sm:$0xff] %v253
    %294 = vst [vmem:[#allocation5 + $0x38] sm:$0xff] %v255
    %295 = vst [vmem:[#allocation5 + $0x40] sm:$0xff] %v186
    %296 = vst [vmem:[#allocation5 + $0x48] sm:$0xff] %v188
    %297 = vst [vmem:[#allocation5 + $0x50] sm:$0xff] %v259
    %298 = vst [vmem:[#allocation5 + $0x58] sm:$0xff] %v261
    %299 = vst [vmem:[#allocation5 + $0x60] sm:$0xff] %v190
    %300 = vst [vmem:[#allocation5 + $0x68] sm:$0xff] %v192
    %301 = vst [vmem:[#allocation5 + $0x70] sm:$0xff] %v263
    %302 = vst [vmem:[#allocation5 + $0x78] sm:$0xff] %v265
    %303 = vst [vmem:[#allocation5 + $0x80] sm:$0xff] %v196
    %304 = vst [vmem:[#allocation5 + $0x88] sm:$0xff] %v198
    %305 = vst [vmem:[#allocation5 + $0x90] sm:$0xff] %v269
    %306 = vst [vmem:[#allocation5 + $0x98] sm:$0xff] %v271
    %307 = vst [vmem:[#allocation5 + $0xa0] sm:$0xff] %v200
    %308 = vst [vmem:[#allocation5 + $0xa8] sm:$0xff] %v202
    %309 = vst [vmem:[#allocation5 + $0xb0] sm:$0xff] %v273
    %310 = vst [vmem:[#allocation5 + $0xb8] sm:$0xff] %v275
    %311 = vst [vmem:[#allocation5 + $0xc0] sm:$0xff] %v206
    %312 = vst [vmem:[#allocation5 + $0xc8] sm:$0xff] %v208
    %313 = vst [vmem:[#allocation5 + $0xd0] sm:$0xff] %v279
    %314 = vst [vmem:[#allocation5 + $0xd8] sm:$0xff] %v281
    %315 = vst [vmem:[#allocation5 + $0xe0] sm:$0xff] %v210
    %316 = vst [vmem:[#allocation5 + $0xe8] sm:$0xff] %v212
    %317 = vst [vmem:[#allocation5 + $0xf0] sm:$0xff] %v283
    %318 = vst [vmem:[#allocation5 + $0xf8] sm:$0xff] %v285
    // Predicated region
    $region18: #{tpu_custom_call.1} parent=1 // pred_check
      _
    $region19: #{tpu_custom_call.1} parent=1 // pred_check_branch
      %320 = sbr.rel (0) target = $region21
    $region20: #{tpu_custom_call.1} parent=1 // pred_region
      %s322 = ssub.s32 4096, 4096
      %323 = vsyncadd [#allocation4], %s322
      %s324 = sshll.u32 [#allocation5], 4
      %s325 = int_to_ptr.vmem [resolvable:$true] %s324
      %330 = dma.vmem_to_hbm [thread:$0]  %s325, 4096, %s3, [#allocation4], 512, 512, 32
    $region21: #{tpu_custom_call.1} parent=1 // pred_fallthru
      _
    // Predicated region
    $region22: #{tpu_custom_call.1} parent=1 // pred_check
      _
    $region23: #{tpu_custom_call.1} parent=1 // pred_check_branch
      %332 = sbr.rel (0) target = $region25
    $region24: #{tpu_custom_call.1} parent=1 // pred_region
      %333 = dma.done [#allocation4], 4096
    $region25: #{tpu_custom_call.1} parent=1 // pred_fallthru
      _
    %334 = vsyncpa [#allocation3], 1
    %335 = vsyncpa [#allocation4], 1

</llo_original>
